<compile_context>
chip_gen: v7x
topology: tpu7x:2x2x1
jax: 0.10.0
libtpu: 0.0.40
codegen_flags: <defaults>
</compile_context>

<pallas_src>
import functools

import jax
import jax.numpy as jnp
from jax.experimental import pallas as pl
from jax.experimental.pallas import tpu as pltpu

EPS = 1e-16
_HALO = 128   # lane-aligned halo width; covers tap offsets up to T-1 <= 128


def _nmfd_kernel(w_ref, h_ref, halo_ref, o_ref, *, T):
    # w_ref   : (n_chan, T*rank)  flattened weights (tiny, grid-resident)
    # h_ref   : (rank, tile_m)    padded activations, columns [j*tm, (j+1)*tm)
    # halo_ref: (rank, 128)       next 128 activation columns [(j+1)*tm, (j+1)*tm+128)
    # o_ref   : (n_chan, tile_m)  output tile along the sample (lane) axis
    tm = o_ref.shape[-1]
    blk = jnp.concatenate([h_ref[...], halo_ref[...]], axis=1)      # (rank, tm+128)
    # im2col stack built in VMEM: rows [t*rank:(t+1)*rank] = Hp[:, m + (T-1-t)]
    hs = jnp.concatenate(
        [blk[:, T - 1 - t:T - 1 - t + tm] for t in range(T)], axis=0)  # (T*rank, tm)
    o_ref[...] = jnp.dot(
        w_ref[...], hs, preferred_element_type=jnp.float32).astype(o_ref.dtype)


def nmfd_forward(W, H, n_sample, *, tile_m=2048):
    """Pallas implementation of torchnmf NMFD.forward (the SeqNMF forward pass).

    W: (n_chan, rank, T) float32
    H: (1, rank, n_sample - T + 1) float32
    returns WxH: (1, n_chan, n_sample) float32
    """
    n_chan, rank, T = W.shape
    Lh = H.shape[-1]
    assert Lh == n_sample - T + 1
    assert T - 1 <= _HALO, "n_convwin > 129 would need a wider halo"
    # TODO(synk): for n_convwin - 1 > 128, fetch ceil((T-1)/128) halo blocks.

    # --- sample-tile selection -------------------------------------------------
    tm = max(128, (int(tile_m) // 128) * 128)
    n_up = pl.cdiv(n_sample, 128) * 128
    if n_up <= tm:
        tm = n_up                       # short input: ONE grid step (no forced split)
    grid_steps = pl.cdiv(n_sample, tm)
    if grid_steps > 1 and grid_steps % 2 == 1:
        # long input: prefer an even step count so v7x's 2 TensorCores balance;
        # harmless (near-zero effect) on single-core v5e/v6e.
        tm = pl.cdiv(pl.cdiv(n_sample, grid_steps + 1), 128) * 128
        grid_steps = pl.cdiv(n_sample, tm)
    n_pad = grid_steps * tm             # padded output length (junk cols sliced off)

    f32 = jnp.float32
    K = T * rank

    # --- W_flat: (n_chan, T*rank), W_flat[c, t*rank + r] = W[c, r, t] ------------
    W_flat = jnp.transpose(W, (0, 2, 1)).reshape(n_chan, K).astype(f32)

    # --- Hp: H left-padded by T-1 zeros, right-padded out to n_pad + 128 ---------
    # X_hat[c, m] = sum_t W[:, :, t] @ Hp[:, m + (T-1-t)]
    Lp = n_pad + _HALO
    Hp = jnp.zeros((rank, Lp), f32)
    Hp = Hp.at[:, T - 1:T - 1 + Lh].set(H[0].astype(f32))

    halo_stride = tm // _HALO           # halo block index advance per main tile

    cost = pl.CostEstimate(
        flops=2 * n_chan * K * n_pad,
        transcendentals=0,
        bytes_accessed=4 * (rank * Lp + grid_steps * rank * _HALO
                            + n_chan * K + n_chan * n_pad),
    )

    out = pl.pallas_call(
        functools.partial(_nmfd_kernel, T=T),
        out_shape=jax.ShapeDtypeStruct((n_chan, n_pad), jnp.float32),
        grid_spec=pl.GridSpec(
            grid=(grid_steps,),
            in_specs=[
                # tiny, genuinely resident weight tile
                pl.BlockSpec((n_chan, K), lambda j: (0, 0)),
                # raw padded activations tiled along the sample axis -> pipelined DMA
                pl.BlockSpec((rank, tm), lambda j: (0, j)),
                # 128-column halo = first lanes of the NEXT tile (block-aligned offset)
                pl.BlockSpec((rank, _HALO), lambda j: (0, (j + 1) * halo_stride)),
            ],
            out_specs=pl.BlockSpec((n_chan, tm), lambda j: (0, j)),
        ),
        compiler_params=pltpu.CompilerParams(
            dimension_semantics=("parallel",),
            # sized once against v7x's 64 MiB physical VMEM; actual use is ~2-3 MiB.
            vmem_limit_bytes=32 * 1024 * 1024,
        ),
        cost_estimate=cost,
    )(W_flat, Hp, Hp)

    return out[:, :n_sample][None]      # (1, n_chan, n_sample)


def _reference_forward(W, H, n_sample):
    """Independent reference: exactly torch F.conv1d(H, W.flip(2), padding=T-1)."""
    T = W.shape[-1]
    return jax.lax.conv_general_dilated(
        H, jnp.flip(W, axis=-1),
        window_strides=(1,), padding=[(T - 1, T - 1)],
        dimension_numbers=("NCH", "OIH", "NCH"))


if __name__ == "__main__":
    # Small shapes consistent with SeqNMF((1, n_chan, n_sample), rank, T=n_convwin)
    n_chan, n_sample, n_convwin, rank = 16, 256, 8, 8

    key = jax.random.PRNGKey(0)
    kw, kh = jax.random.split(key)

    # reinit_feats: W = |rand|;  renorm_feats('l1'): W[:, r, :] /= sum, then += eps
    W = jax.random.uniform(kw, (n_chan, rank, n_convwin), jnp.float32)
    W = W / jnp.sum(W, axis=(0, 2), keepdims=True) + EPS
    # reinit_coefs: H = |rand|
    H = jax.random.uniform(kh, (1, rank, n_sample - n_convwin + 1), jnp.float32)

    # TODO(synk): loss()/penalty()/deconv_coefs()/motif_compare_spatiotemp() are
    # host-side numpy/scipy utilities outside forward(); not implemented here.

    # --- short input: single grid step ---------------------------------------
    WxH = jax.block_until_ready(nmfd_forward(W, H, n_sample))
    ref = _reference_forward(W, H, n_sample)
    assert WxH.shape == (1, n_chan, n_sample), WxH.shape
    assert jnp.allclose(WxH, ref, rtol=1e-5, atol=1e-5), float(
        jnp.max(jnp.abs(WxH - ref)))

    # --- ragged length just over one tile: 2-step grid + junk-column slicing --
    n_sample2 = 2048 + 64
    H2 = jax.random.uniform(kh, (1, rank, n_sample2 - n_convwin + 1), jnp.float32)
    WxH2 = jax.block_until_ready(nmfd_forward(W, H2, n_sample2))
    ref2 = _reference_forward(W, H2, n_sample2)
    assert WxH2.shape == (1, n_chan, n_sample2), WxH2.shape
    assert jnp.allclose(WxH2, ref2, rtol=1e-5, atol=1e-5), float(
        jnp.max(jnp.abs(WxH2 - ref2)))

    # --- odd->even step rebalancing path (3 steps -> 4 balanced steps) --------
    n_sample3 = 5000
    H3 = jax.random.uniform(kh, (1, rank, n_sample3 - n_convwin + 1), jnp.float32)
    WxH3 = jax.block_until_ready(nmfd_forward(W, H3, n_sample3))
    ref3 = _reference_forward(W, H3, n_sample3)
    assert WxH3.shape == (1, n_chan, n_sample3), WxH3.shape
    assert jnp.allclose(WxH3, ref3, rtol=1e-5, atol=1e-5), float(
        jnp.max(jnp.abs(WxH3 - ref3)))

    print("KERNEL_OK")
</pallas_src>

<mosaic_0001>
module attributes {stable_mosaic.version = 11 : i64} {
  func.func @_nmfd_kernel(%arg0: i32, %arg1: memref<16x64xf32, #tpu.memory_space<vmem>>, %arg2: memref<8x256xf32, #tpu.memory_space<vmem>>, %arg3: memref<8x128xf32, #tpu.memory_space<vmem>>, %arg4: memref<16x256xf32, #tpu.memory_space<vmem>>) attributes {dimension_semantics = [#tpu.dimension_semantics<parallel>], iteration_bounds = array<i64: 1>, scalar_prefetch = 0 : i64, scratch_operands = 0 : i64, tpu.core_type = #tpu.core_type<tc>, window_params = [{pipeline_mode = #tpu.pipeline_mode<synchronous>, transform_indices = @transform_0, window_bounds = array<i64: 16, 64>}, {transform_indices = @transform_1, window_bounds = array<i64: 8, 256>}, {transform_indices = @transform_2, window_bounds = array<i64: 8, 128>}, {transform_indices = @transform_3, window_bounds = array<i64: 16, 256>}]} {
    %c0 = arith.constant 0 : index
    %c0_0 = arith.constant 0 : index
    %0 = vector.load %arg2[%c0, %c0_0] : memref<8x256xf32, #tpu.memory_space<vmem>>, vector<8x256xf32>
    %c0_1 = arith.constant 0 : index
    %c0_2 = arith.constant 0 : index
    %1 = vector.load %arg3[%c0_1, %c0_2] : memref<8x128xf32, #tpu.memory_space<vmem>>, vector<8x128xf32>
    %2 = tpu.concatenate %0, %1 in 1 : vector<8x256xf32>, vector<8x128xf32> -> vector<8x384xf32>
    %3 = vector.extract_strided_slice %2 {offsets = [0, 7], sizes = [8, 256], strides = [1, 1]} : vector<8x384xf32> to vector<8x256xf32>
    %4 = vector.extract_strided_slice %2 {offsets = [0, 6], sizes = [8, 256], strides = [1, 1]} : vector<8x384xf32> to vector<8x256xf32>
    %5 = vector.extract_strided_slice %2 {offsets = [0, 5], sizes = [8, 256], strides = [1, 1]} : vector<8x384xf32> to vector<8x256xf32>
    %6 = vector.extract_strided_slice %2 {offsets = [0, 4], sizes = [8, 256], strides = [1, 1]} : vector<8x384xf32> to vector<8x256xf32>
    %7 = vector.extract_strided_slice %2 {offsets = [0, 3], sizes = [8, 256], strides = [1, 1]} : vector<8x384xf32> to vector<8x256xf32>
    %8 = vector.extract_strided_slice %2 {offsets = [0, 2], sizes = [8, 256], strides = [1, 1]} : vector<8x384xf32> to vector<8x256xf32>
    %9 = vector.extract_strided_slice %2 {offsets = [0, 1], sizes = [8, 256], strides = [1, 1]} : vector<8x384xf32> to vector<8x256xf32>
    %10 = vector.extract_strided_slice %2 {offsets = [0, 0], sizes = [8, 256], strides = [1, 1]} : vector<8x384xf32> to vector<8x256xf32>
    %11 = tpu.concatenate %3, %4, %5, %6, %7, %8, %9, %10 in 0 : vector<8x256xf32>, vector<8x256xf32>, vector<8x256xf32>, vector<8x256xf32>, vector<8x256xf32>, vector<8x256xf32>, vector<8x256xf32>, vector<8x256xf32> -> vector<64x256xf32>
    %c0_3 = arith.constant 0 : index
    %c0_4 = arith.constant 0 : index
    %12 = vector.load %arg1[%c0_3, %c0_4] : memref<16x64xf32, #tpu.memory_space<vmem>>, vector<16x64xf32>
    %cst = arith.constant dense<0.000000e+00> : vector<16x256xf32>
    %13 = tpu.matmul %12, %11, %cst {dimension_numbers = #tpu.dot_dimension_numbers<[1], [0], [0], [1], [0, 0, 1, 1], [], []>} : vector<16x64xf32>, vector<64x256xf32>, vector<16x256xf32> -> vector<16x256xf32>
    %c0_5 = arith.constant 0 : index
    %c0_6 = arith.constant 0 : index
    %14 = vector.load %arg4[%c0_5, %c0_6] : memref<16x256xf32, #tpu.memory_space<vmem>>, vector<16x256xf32>
    tpu.vector_store %arg4[%c0_5, %c0_6], %13 {strides = array<i32>} : memref<16x256xf32, #tpu.memory_space<vmem>>, vector<16x256xf32>,
    return
  }
  func.func @transform_0(%arg0: i32) -> (i32, i32) {
    %c0_i32 = arith.constant 0 : i32
    %c0_i32_0 = arith.constant 0 : i32
    %c0_i32_1 = arith.constant 0 : i32
    return %c0_i32, %c0_i32_0 : i32, i32
  }
  func.func @transform_1(%arg0: i32) -> (i32, i32) {
    %c0_i32 = arith.constant 0 : i32
    %c0_i32_0 = arith.constant 0 : i32
    return %c0_i32, %arg0 : i32, i32
  }
  func.func @transform_2(%arg0: i32) -> (i32, i32) {
    %c1_i32 = arith.constant 1 : i32
    %0 = arith.addi %arg0, %c1_i32 : i32
    %c2_i32 = arith.constant 2 : i32
    %1 = arith.muli %0, %c2_i32 : i32
    %c0_i32 = arith.constant 0 : i32
    %c0_i32_0 = arith.constant 0 : i32
    return %c0_i32, %1 : i32, i32
  }
  func.func @transform_3(%arg0: i32) -> (i32, i32) {
    %c0_i32 = arith.constant 0 : i32
    %c0_i32_0 = arith.constant 0 : i32
    return %c0_i32, %arg0 : i32, i32
  }
}

</mosaic_0001>

<llo_original>
// kernel: tpu_custom_call.1
$region0: #{tpu_custom_call.1}
  #allocation0 [shape = 'u32[]', space=smem, size = 0x4, offset = 0x4, fixed_abs, tag = 'smem constant byte address 0x4 - core index']
  #allocation1 [shape = 'u32[144,128]{1,0:T(1,128)}', space=vmem, size = 0x12000, scoped, tag = 'internal scratch']
  %s0 = inlined_call_operand.hbm [shape: f32[16,64], index: 0, kind: input, shape index: {}]
  %s1 = inlined_call_operand.hbm [shape: f32[8,384], index: 1, kind: input, shape index: {}]
  %s2 = inlined_call_operand.hbm [shape: f32[8,384], index: 2, kind: input, shape index: {}]
  %s3 = inlined_call_operand.hbm [shape: f32[16,256], index: 3, kind: output, shape index: {}]
  %s4 = sld [smem:[#allocation0]]
  $region34: #{tpu_custom_call.1} parent=0
    _
  %s6 = ssub.s32 1, %s4
  %s7 = scalar_select 0, %s6, %s4
  $region1: #{tpu_custom_call.1} parent=0
    #allocation2 [shape = 'u8[8192]{0}', space=vmem, size = 0x2000, scoped, tag = 'input window, operand 0, single buffered']
    #allocation3 [shape = 's32[1]{0}', space=sflag, size = 0x4, scoped, tag = 'scoped memory for tpu_custom_call.1']
    #allocation4 [shape = 's32[1]{0}', space=sflag, size = 0x4, scoped, tag = 'scoped memory for tpu_custom_call.1']
    #allocation5 [shape = 'u8[8192]{0}', space=vmem, size = 0x2000, scoped, tag = 'input window, operand 1, single buffered']
    #allocation6 [shape = 's32[1]{0}', space=sflag, size = 0x4, scoped, tag = 'scoped memory for tpu_custom_call.1']
    #allocation7 [shape = 'u8[4096]{0}', space=vmem, size = 0x1000, scoped, tag = 'input window, operand 2, single buffered']
    #allocation8 [shape = 'u8[16384]{0}', space=vmem, size = 0x4000, scoped, tag = 'output window, operand 0, single buffered']
    %8 = vsyncpa [#allocation3], 0
    %9 = vsyncpa [#allocation6], 0
    %10 = vsyncpa [#allocation4], 0
    // Predicated region
    $region2: #{tpu_custom_call.1} parent=1 // pred_check
      _
    $region3: #{tpu_custom_call.1} parent=1 // pred_check_branch
      %12 = sbr.rel (0) target = $region5
    $region4: #{tpu_custom_call.1} parent=1 // pred_region
      %s14 = ssub.s32 256, 256
      %15 = vsyncadd [#allocation3], %s14
      %s16 = sshll.u32 [#allocation2], 4
      %s17 = int_to_ptr.vmem [resolvable:$true] %s16
      %22 = dma.hbm_to_vmem [thread:$0]  %s0, 256, %s17, [#allocation3], 128, 128, 8
    $region5: #{tpu_custom_call.1} parent=1 // pred_fallthru
      _
    // Predicated region
    $region6: #{tpu_custom_call.1} parent=1 // pred_check
      _
    $region7: #{tpu_custom_call.1} parent=1 // pred_check_branch
      %24 = sbr.rel (0) target = $region9
    $region8: #{tpu_custom_call.1} parent=1 // pred_region
      %s26 = ssub.s32 256, 256
      %27 = vsyncadd [#allocation6], %s26
      %s29 = sshll.u32 [#allocation5], 4
      %s30 = int_to_ptr.vmem [resolvable:$true] %s29
      %32 = dma.hbm_to_vmem [thread:$0]  %s1, 256, %s30, [#allocation6]
    $region9: #{tpu_custom_call.1} parent=1 // pred_fallthru
      _
    // Predicated region
    $region10: #{tpu_custom_call.1} parent=1 // pred_check
      _
    $region11: #{tpu_custom_call.1} parent=1 // pred_check_branch
      %34 = sbr.rel (0) target = $region13
    $region12: #{tpu_custom_call.1} parent=1 // pred_region
      %s35 = sadd.s32 0, 1
      %s36 = smul.u32 %s35, 2
      %s38 = ssub.s32 128, 128
      %39 = vsyncadd [#allocation6], %s38
      %s40 = smul.addr %s36, 128
      %s41 = scalar_lea.hbm %s2, %s40
      %s43 = sshll.u32 [#allocation7], 4
      %s44 = int_to_ptr.vmem [resolvable:$true] %s43
      %46 = dma.hbm_to_vmem [thread:$0]  %s41, 128, %s44, [#allocation6]
    $region13: #{tpu_custom_call.1} parent=1 // pred_fallthru
      _
    // Predicated region
    $region14: #{tpu_custom_call.1} parent=1 // pred_check
      _
    $region15: #{tpu_custom_call.1} parent=1 // pred_check_branch
      %48 = sbr.rel (0) target = $region17
    $region16: #{tpu_custom_call.1} parent=1 // pred_region
      %49 = dma.done [#allocation3], 256
    $region17: #{tpu_custom_call.1} parent=1 // pred_fallthru
      _
    // Predicated region
    $region18: #{tpu_custom_call.1} parent=1 // pred_check
      _
    $region19: #{tpu_custom_call.1} parent=1 // pred_check_branch
      %51 = sbr.rel (0) target = $region21
    $region20: #{tpu_custom_call.1} parent=1 // pred_region
      %52 = dma.done [#allocation6], 256
    $region21: #{tpu_custom_call.1} parent=1 // pred_fallthru
      _
    // Predicated region
    $region22: #{tpu_custom_call.1} parent=1 // pred_check
      _
    $region23: #{tpu_custom_call.1} parent=1 // pred_check_branch
      %54 = sbr.rel (0) target = $region25
    $region24: #{tpu_custom_call.1} parent=1 // pred_region
      %55 = dma.done [#allocation6], 128
    $region25: #{tpu_custom_call.1} parent=1 // pred_fallthru
      _
    %s56 = sadd.s32 0, 1
    %s57 = smul.u32 %s56, 2
    %v58 = vld [vmem:[#allocation5] sm:$0xff]
    %v59 = vld [vmem:[#allocation5 + $0x8] sm:$0xff]
    %v60 = vld [vmem:[#allocation7] sm:$0xff]
    %64 = vrot.lane.b32.xlu0 %v58, 1
    %v65 = vpop.permute.xlu0 %64
    %66 = vrot.lane.b32.xlu0 %v59, 1
    %v67 = vpop.permute.xlu0 %66
    %68 = vrot.lane.b32.xlu0 %v60, 1
    %v69 = vpop.permute.xlu0 %68
    %vm70 = vcmask 7168
    %v71 = vsel %vm70, %v65, %v67
    %v72 = vsel %vm70, %v67, %v69
    %73 = vrot.lane.b32.xlu0 %v58, 2
    %v74 = vpop.permute.xlu0 %73
    %75 = vrot.lane.b32.xlu0 %v59, 2
    %v76 = vpop.permute.xlu0 %75
    %77 = vrot.lane.b32.xlu0 %v60, 2
    %v78 = vpop.permute.xlu0 %77
    %vm79 = vcmask 15360
    %v80 = vsel %vm79, %v74, %v76
    %v81 = vsel %vm79, %v76, %v78
    %82 = vrot.lane.b32.xlu0 %v58, 3
    %v83 = vpop.permute.xlu0 %82
    %84 = vrot.lane.b32.xlu0 %v59, 3
    %v85 = vpop.permute.xlu0 %84
    %86 = vrot.lane.b32.xlu0 %v60, 3
    %v87 = vpop.permute.xlu0 %86
    %vm88 = vcmask 23552
    %v89 = vsel %vm88, %v83, %v85
    %v90 = vsel %vm88, %v85, %v87
    %91 = vrot.lane.b32.xlu0 %v58, 4
    %v92 = vpop.permute.xlu0 %91
    %93 = vrot.lane.b32.xlu0 %v59, 4
    %v94 = vpop.permute.xlu0 %93
    %95 = vrot.lane.b32.xlu0 %v60, 4
    %v96 = vpop.permute.xlu0 %95
    %vm97 = vcmask 31744
    %v98 = vsel %vm97, %v92, %v94
    %v99 = vsel %vm97, %v94, %v96
    %100 = vrot.lane.b32.xlu0 %v58, 5
    %v101 = vpop.permute.xlu0 %100
    %102 = vrot.lane.b32.xlu0 %v59, 5
    %v103 = vpop.permute.xlu0 %102
    %104 = vrot.lane.b32.xlu0 %v60, 5
    %v105 = vpop.permute.xlu0 %104
    %vm106 = vcmask 39936
    %v107 = vsel %vm106, %v101, %v103
    %v108 = vsel %vm106, %v103, %v105
    %109 = vrot.lane.b32.xlu0 %v58, 6
    %v110 = vpop.permute.xlu0 %109
    %111 = vrot.lane.b32.xlu0 %v59, 6
    %v112 = vpop.permute.xlu0 %111
    %113 = vrot.lane.b32.xlu0 %v60, 6
    %v114 = vpop.permute.xlu0 %113
    %vm115 = vcmask 48128
    %v116 = vsel %vm115, %v110, %v112
    %v117 = vsel %vm115, %v112, %v114
    %118 = vrot.lane.b32.xlu0 %v58, 7
    %v119 = vpop.permute.xlu0 %118
    %120 = vrot.lane.b32.xlu0 %v59, 7
    %v121 = vpop.permute.xlu0 %120
    %vm122 = vcmask 56320
    %v123 = vsel %vm122, %v119, %v121
    %v124 = vld [vmem:[#allocation2] sm:$0xff]
    %v125 = vld [vmem:[#allocation2 + $0x8] sm:$0xff]
    %126 = vrot.lane.b32.xlu0 %v58, 121
    %v127 = vpop.permute.xlu0 %126
    %128 = vrot.lane.b32.xlu0 %v59, 121
    %v129 = vpop.permute.xlu0 %128
    %130 = vrot.lane.b32.xlu0 %v60, 121
    %v131 = vpop.permute.xlu0 %130
    %132 = vrot.lane.b32.xlu0 %v65, 121
    %v133 = vpop.permute.xlu0 %132
    %134 = vrot.lane.b32.xlu0 %v71, 121
    %v135 = vpop.permute.xlu0 %134
    %136 = vrot.lane.b32.xlu0 %v72, 121
    %v137 = vpop.permute.xlu0 %136
    %138 = vrot.lane.b32.xlu0 %v74, 121
    %v139 = vpop.permute.xlu0 %138
    %140 = vrot.lane.b32.xlu0 %v80, 121
    %v141 = vpop.permute.xlu0 %140
    %142 = vrot.lane.b32.xlu0 %v81, 121
    %v143 = vpop.permute.xlu0 %142
    %144 = vrot.lane.b32.xlu0 %v83, 121
    %v145 = vpop.permute.xlu0 %144
    %146 = vrot.lane.b32.xlu0 %v89, 121
    %v147 = vpop.permute.xlu0 %146
    %148 = vrot.lane.b32.xlu0 %v90, 121
    %v149 = vpop.permute.xlu0 %148
    %150 = vrot.lane.b32.xlu0 %v92, 121
    %v151 = vpop.permute.xlu0 %150
    %152 = vrot.lane.b32.xlu0 %v98, 121
    %v153 = vpop.permute.xlu0 %152
    %154 = vrot.lane.b32.xlu0 %v99, 121
    %v155 = vpop.permute.xlu0 %154
    %156 = vrot.lane.b32.xlu0 %v101, 121
    %v157 = vpop.permute.xlu0 %156
    %158 = vrot.lane.b32.xlu0 %v107, 121
    %v159 = vpop.permute.xlu0 %158
    %160 = vrot.lane.b32.xlu0 %v108, 121
    %v161 = vpop.permute.xlu0 %160
    %162 = vrot.lane.b32.xlu0 %v110, 121
    %v163 = vpop.permute.xlu0 %162
    %164 = vrot.lane.b32.xlu0 %v116, 121
    %v165 = vpop.permute.xlu0 %164
    %166 = vrot.lane.b32.xlu0 %v117, 121
    %v167 = vpop.permute.xlu0 %166
    %168 = vrot.lane.b32.xlu0 %v119, 121
    %v169 = vpop.permute.xlu0 %168
    %170 = vrot.lane.b32.xlu0 %v123, 121
    %v171 = vpop.permute.xlu0 %170
    %172 = vrot.lane.b32.xlu0 %v121, 121
    %v173 = vpop.permute.xlu0 %172
    %vm174 = vcmask 990208
    %v175 = vsel %vm174, %v127, %v129
    %v176 = vsel %vm174, %v129, %v131
    %v177 = vsel %vm174, %v133, %v135
    %v178 = vsel %vm174, %v135, %v137
    %v179 = vsel %vm174, %v139, %v141
    %v180 = vsel %vm174, %v141, %v143
    %v181 = vsel %vm174, %v145, %v147
    %v182 = vsel %vm174, %v147, %v149
    %v183 = vsel %vm174, %v151, %v153
    %v184 = vsel %vm174, %v153, %v155
    %v185 = vsel %vm174, %v157, %v159
    %v186 = vsel %vm174, %v159, %v161
    %v187 = vsel %vm174, %v163, %v165
    %v188 = vsel %vm174, %v165, %v167
    %v189 = vsel %vm174, %v169, %v171
    %v190 = vsel %vm174, %v171, %v173
    %vm207 = vcmask 523264
    %v209 = vsel %vm207, %v124, 0
    %v212 = vsel %vm207, %v125, 0
    %214 = vmatprep.subr.mxu0 %v176
    %215 = vmatpush1.msra.mxu0 %v175
    %216 = vmatprep.subr.mxu0 %v178
    %217 = vmatpush1.msra.mxu0 %v177
    %218 = vmatprep.subr.mxu0 %v180
    %219 = vmatpush1.msra.mxu0 %v179
    %220 = vmatprep.subr.mxu0 %v182
    %221 = vmatpush1.msra.mxu0 %v181
    %222 = vmatprep.subr.mxu0 %v184
    %223 = vmatpush1.msra.mxu0 %v183
    %224 = vmatprep.subr.mxu0 %v186
    %225 = vmatpush1.msra.mxu0 %v185
    %226 = vmatprep.subr.mxu0 %v188
    %227 = vmatpush1.msra.mxu0 %v187
    %228 = vmatprep.subr.mxu0 %v190
    %229 = vmatpush1.msra.mxu0 %v189
    %230 = vmatprep.subr.mxu0 0.0
    %231 = vmatpush1.msra.mxu0 0.0
    %232 = vmatprep.subr.mxu0 0.0
    %233 = vmatpush1.msra.mxu0 0.0
    %234 = vmatprep.subr.mxu0 0.0
    %235 = vmatpush1.msra.mxu0 0.0
    %236 = vmatprep.subr.mxu0 0.0
    %237 = vmatpush1.msra.mxu0 0.0
    %238 = vmatprep.subr.mxu0 0.0
    %239 = vmatpush1.msra.mxu0 0.0
    %240 = vmatprep.subr.mxu0 0.0
    %241 = vmatpush1.msra.mxu0 0.0
    %242 = vmatprep.subr.mxu0 0.0
    %243 = vmatpush1.msra.mxu0 0.0
    %244 = vmatprep.subr.mxu0 0.0
    %245 = vmatpush1.msra.mxu0 0.0
    %246 = vmatprep.subr.mxu0 0.0
    %247 = vmatpush1.msra.mxu0 0.0
    %248 = vmatprep.subr.mxu0 0.0
    %249 = vmatpush1.msra.mxu0 0.0
    %250 = vmatprep.subr.mxu0 0.0
    %251 = vmatpush1.msra.mxu0 0.0
    %252 = vmatprep.subr.mxu0 0.0
    %253 = vmatpush1.msra.mxu0 0.0
    %254 = vmatprep.subr.mxu0 0.0
    %255 = vmatpush1.msra.mxu0 0.0
    %256 = vmatprep.subr.mxu0 0.0
    %257 = vmatpush1.msra.mxu0 0.0
    %258 = vmatprep.subr.mxu0 0.0
    %259 = vmatpush1.msra.mxu0 0.0
    %260 = vmatprep.subr.mxu0 0.0
    %261 = vmatpush1.msra.mxu0 0.0
    %262 = vmatprep.subr.mxu0 0.0
    %263 = vmatpush1.msra.mxu0 0.0
    %264 = vmatprep.subr.mxu0 0.0
    %265 = vmatpush1.msra.mxu0 0.0
    %266 = vmatprep.subr.mxu0 0.0
    %267 = vmatpush1.msra.mxu0 0.0
    %268 = vmatprep.subr.mxu0 0.0
    %269 = vmatpush1.msra.mxu0 0.0
    %270 = vmatprep.subr.mxu0 0.0
    %271 = vmatpush1.msra.mxu0 0.0
    %272 = vmatprep.subr.mxu0 0.0
    %273 = vmatpush1.msra.mxu0 0.0
    %274 = vmatprep.subr.mxu0 0.0
    %275 = vmatpush1.msra.mxu0 0.0
    %276 = vmatprep.subr.mxu0 0.0
    %277 = vmatpush1.msra.mxu0 0.0
    %278 = vmatprep.mubr.f32.mxu0 0.0
    %279 = vmatmul.mubr.f32.gmra.mrb[0].mxu0 %v209
    %v280 = vpop.f32.mrb[0].mxu0
    %v281 = vadd.f32 0.0, %v280
    %v282 = vpop.f32.mrb[0].mxu0
    %v283 = vadd.f32 0.0, %v282
    %284 = vmatprep.mubr.f32.mxu0 0.0
    %285 = vmatmul.mubr.f32.gmra.mrb[0].mxu0 %v212
    %v286 = vpop.f32.mrb[0].mxu0
    %v287 = vadd.f32 0.0, %v286
    %v288 = vpop.f32.mrb[0].mxu0
    %v289 = vadd.f32 0.0, %v288
    %290 = vdwg.mxu0
    %291 = vst [vmem:[#allocation8] sm:$0xff] %v281
    %292 = vst [vmem:[#allocation8 + $0x8] sm:$0xff] %v283
    %293 = vst [vmem:[#allocation8 + $0x10] sm:$0xff] %v287
    %294 = vst [vmem:[#allocation8 + $0x18] sm:$0xff] %v289
    // Predicated region
    $region26: #{tpu_custom_call.1} parent=1 // pred_check
      _
    $region27: #{tpu_custom_call.1} parent=1 // pred_check_branch
      %296 = sbr.rel (0) target = $region29
    $region28: #{tpu_custom_call.1} parent=1 // pred_region
      %s298 = ssub.s32 512, 512
      %299 = vsyncadd [#allocation4], %s298
      %s300 = sshll.u32 [#allocation8], 4
      %s301 = int_to_ptr.vmem [resolvable:$true] %s300
      %306 = dma.vmem_to_hbm [thread:$0]  %s301, 512, %s3, [#allocation4], 256, 256, 16
    $region29: #{tpu_custom_call.1} parent=1 // pred_fallthru
      _
    // Predicated region
    $region30: #{tpu_custom_call.1} parent=1 // pred_check
      _
    $region31: #{tpu_custom_call.1} parent=1 // pred_check_branch
      %308 = sbr.rel (0) target = $region33
    $region32: #{tpu_custom_call.1} parent=1 // pred_region
      %309 = dma.done [#allocation4], 512
    $region33: #{tpu_custom_call.1} parent=1 // pred_fallthru
      _
    %310 = vsyncpa [#allocation3], 1
    %311 = vsyncpa [#allocation6], 1
    %312 = vsyncpa [#allocation4], 1

</llo_original>
